<compile_context>
chip_gen: v6e
topology: v6e:2x2x1
jax: 0.10.0
libtpu: 0.0.40
codegen_flags: <defaults>
</compile_context>

<pallas_src>
import jax
import jax.numpy as jnp
from jax.experimental import pallas as pl
from jax.experimental.pallas import tpu as pltpu

HIDDEN = 250       # Actor.hidden_layer (logical)
HIDDEN_PAD = 256   # storage width, multiple of 128 lanes


def _round_up(n, m):
    return ((n + m - 1) // m) * m


def actor_kernel(s_ref, w1_ref, b1_ref, w2_ref, b2_ref, q_ref):
    # layer 1: Linear(state_dim -> HIDDEN_PAD) + ReLU.  bf16 operands, f32 MXU acc.
    x = s_ref[...].astype(jnp.bfloat16)
    h = jnp.dot(x, w1_ref[...], preferred_element_type=jnp.float32)
    h = jnp.maximum(h + b1_ref[...], 0.0)

    # layer 2: Linear(HIDDEN_PAD -> action_dim)
    logits = jnp.dot(h.astype(jnp.bfloat16), w2_ref[...],
                     preferred_element_type=jnp.float32) + b2_ref[...]

    # softmax over the action axis (numerically stable)
    m = jnp.max(logits, axis=-1, keepdims=True)
    e = jnp.exp(logits - m)
    q_ref[...] = e / jnp.sum(e, axis=-1, keepdims=True)


def actor_forward(state, w1, b1, w2, b2, *, tile_b=512):
    """state: (B, state_dim) f32 -> Q: (B, action_dim) f32 (rows sum to 1)."""
    B, S = state.shape
    H = w1.shape[1]
    A = w2.shape[1]

    # shrink the tile for tiny batches, keep it a multiple of 8 sublanes
    tile_b = min(tile_b, _round_up(B, 8))
    Bp = _round_up(B, tile_b)
    if Bp != B:
        state = jnp.pad(state, ((0, Bp - B), (0, 0)))

    grid = (Bp // tile_b,)
    out = pl.pallas_call(
        actor_kernel,
        out_shape=jax.ShapeDtypeStruct((Bp, A), jnp.float32),
        grid=grid,
        in_specs=[
            pl.BlockSpec((tile_b, S), lambda i: (i, 0)),   # state tile, streamed
            pl.BlockSpec((S, H),      lambda i: (0, 0)),   # W1, resident
            pl.BlockSpec((1, H),      lambda i: (0, 0)),   # b1, resident
            pl.BlockSpec((H, A),      lambda i: (0, 0)),   # W2, resident
            pl.BlockSpec((1, A),      lambda i: (0, 0)),   # b2, resident
        ],
        out_specs=pl.BlockSpec((tile_b, A), lambda i: (i, 0)),
        compiler_params=pltpu.CompilerParams(
            dimension_semantics=("parallel",)),
    )(state, w1, b1.reshape(1, -1), w2, b2.reshape(1, -1))
    return out[:B]


def init_params(key, state_dim, action_dim):
    """Deterministic init matching nn.Linear's U(-1/sqrt(fan_in), 1/sqrt(fan_in)),
    then zero-padded 250 -> 256 and weights cast to bf16 for storage."""
    k1, k2, k3, k4 = jax.random.split(key, 4)
    bound1 = 1.0 / jnp.sqrt(float(state_dim))
    bound2 = 1.0 / jnp.sqrt(float(HIDDEN))
    w1 = jax.random.uniform(k1, (state_dim, HIDDEN), jnp.float32, -bound1, bound1)
    b1 = jax.random.uniform(k2, (HIDDEN,), jnp.float32, -bound1, bound1)
    w2 = jax.random.uniform(k3, (HIDDEN, action_dim), jnp.float32, -bound2, bound2)
    b2 = jax.random.uniform(k4, (action_dim,), jnp.float32, -bound2, bound2)

    # zero-pad hidden dim to 256: padded columns/rows contribute exactly zero.
    w1p = jnp.pad(w1, ((0, 0), (0, HIDDEN_PAD - HIDDEN))).astype(jnp.bfloat16)
    b1p = jnp.pad(b1, (0, HIDDEN_PAD - HIDDEN))
    w2p = jnp.pad(w2, ((0, HIDDEN_PAD - HIDDEN), (0, 0))).astype(jnp.bfloat16)
    return w1p, b1p, w2p, b2


if __name__ == "__main__":
    key = jax.random.PRNGKey(0)
    k_state, k_params = jax.random.split(key)

    batch, state_dim, action_dim = 2, 8, 4
    state = jax.random.normal(k_state, (batch, state_dim), jnp.float32)
    w1, b1, w2, b2 = init_params(k_params, state_dim, action_dim)

    q = actor_forward(state, w1, b1, w2, b2)
    jax.block_until_ready(q)

    # reference in plain JAX with the same bf16 operands / f32 accumulation
    h_ref = jnp.maximum(
        jnp.dot(state.astype(jnp.bfloat16), w1,
                preferred_element_type=jnp.float32) + b1, 0.0)
    logits_ref = jnp.dot(h_ref.astype(jnp.bfloat16), w2,
                         preferred_element_type=jnp.float32) + b2
    ref = jax.nn.softmax(logits_ref, axis=-1)

    assert q.shape == (batch, action_dim), q.shape
    assert jnp.allclose(jnp.sum(q, axis=-1), 1.0, atol=1e-4)
    assert jnp.allclose(q, ref, atol=1e-4), (q, ref)

    print("KERNEL_OK")
</pallas_src>

<mosaic_0001>
module attributes {stable_mosaic.version = 11 : i64} {
  func.func @actor_kernel(%arg0: i32, %arg1: memref<8x8xf32, #tpu.memory_space<vmem>>, %arg2: memref<8x256xbf16, #tpu.memory_space<vmem>>, %arg3: memref<1x256xf32, #tpu.memory_space<vmem>>, %arg4: memref<256x4xbf16, #tpu.memory_space<vmem>>, %arg5: memref<1x4xf32, #tpu.memory_space<vmem>>, %arg6: memref<8x4xf32, #tpu.memory_space<vmem>>) attributes {dimension_semantics = [#tpu.dimension_semantics<parallel>], iteration_bounds = array<i64: 1>, scalar_prefetch = 0 : i64, scratch_operands = 0 : i64, tpu.core_type = #tpu.core_type<tc>, window_params = [{transform_indices = @transform_0, window_bounds = array<i64: 8, 8>}, {pipeline_mode = #tpu.pipeline_mode<synchronous>, transform_indices = @transform_1, window_bounds = array<i64: 8, 256>}, {pipeline_mode = #tpu.pipeline_mode<synchronous>, transform_indices = @transform_2, window_bounds = array<i64: 1, 256>}, {pipeline_mode = #tpu.pipeline_mode<synchronous>, transform_indices = @transform_3, window_bounds = array<i64: 256, 4>}, {pipeline_mode = #tpu.pipeline_mode<synchronous>, transform_indices = @transform_4, window_bounds = array<i64: 1, 4>}, {transform_indices = @transform_5, window_bounds = array<i64: 8, 4>}]} {
    %c0 = arith.constant 0 : index
    %c0_0 = arith.constant 0 : index
    %0 = vector.load %arg1[%c0, %c0_0] : memref<8x8xf32, #tpu.memory_space<vmem>>, vector<8x8xf32>
    %1 = arith.truncf %0 : vector<8x8xf32> to vector<8x8xbf16>
    %c0_1 = arith.constant 0 : index
    %c0_2 = arith.constant 0 : index
    %2 = vector.load %arg2[%c0_1, %c0_2] : memref<8x256xbf16, #tpu.memory_space<vmem>>, vector<8x256xbf16>
    %cst = arith.constant dense<0.000000e+00> : vector<8x256xf32>
    %3 = tpu.matmul %1, %2, %cst {dimension_numbers = #tpu.dot_dimension_numbers<[1], [0], [0], [1], [0, 0, 1, 1], [], []>} : vector<8x8xbf16>, vector<8x256xbf16>, vector<8x256xf32> -> vector<8x256xf32>
    %c0_3 = arith.constant 0 : index
    %c0_4 = arith.constant 0 : index
    %4 = vector.load %arg3[%c0_3, %c0_4] : memref<1x256xf32, #tpu.memory_space<vmem>>, vector<1x256xf32>
    %5 = vector.broadcast %4 : vector<1x256xf32> to vector<8x256xf32>
    %6 = arith.addf %3, %5 : vector<8x256xf32>
    %cst_5 = arith.constant 0.000000e+00 : f32
    %7 = vector.broadcast %cst_5 : f32 to vector<8x256xf32>
    %8 = arith.maximumf %6, %7 : vector<8x256xf32>
    %9 = arith.truncf %8 : vector<8x256xf32> to vector<8x256xbf16>
    %c0_6 = arith.constant 0 : index
    %c0_7 = arith.constant 0 : index
    %10 = vector.load %arg4[%c0_6, %c0_7] : memref<256x4xbf16, #tpu.memory_space<vmem>>, vector<256x4xbf16>
    %cst_8 = arith.constant dense<0.000000e+00> : vector<8x4xf32>
    %11 = tpu.matmul %9, %10, %cst_8 {dimension_numbers = #tpu.dot_dimension_numbers<[1], [0], [0], [1], [0, 0, 1, 1], [], []>} : vector<8x256xbf16>, vector<256x4xbf16>, vector<8x4xf32> -> vector<8x4xf32>
    %c0_9 = arith.constant 0 : index
    %c0_10 = arith.constant 0 : index
    %12 = vector.load %arg5[%c0_9, %c0_10] : memref<1x4xf32, #tpu.memory_space<vmem>>, vector<1x4xf32>
    %13 = vector.broadcast %12 : vector<1x4xf32> to vector<8x4xf32>
    %14 = arith.addf %11, %13 : vector<8x4xf32>
    %cst_11 = arith.constant dense<0xFF800000> : vector<8xf32>
    %15 = vector.multi_reduction <maximumf>, %14, %cst_11 [1] : vector<8x4xf32> to vector<8xf32>
    %16 = vector.shape_cast %15 : vector<8xf32> to vector<8x1xf32>
    %17 = vector.broadcast %16 : vector<8x1xf32> to vector<8x4xf32>
    %18 = arith.subf %14, %17 : vector<8x4xf32>
    %19 = math.exp %18 : vector<8x4xf32>
    %cst_12 = arith.constant dense<0.000000e+00> : vector<8xf32>
    %20 = vector.multi_reduction <add>, %19, %cst_12 [1] : vector<8x4xf32> to vector<8xf32>
    %21 = vector.shape_cast %20 : vector<8xf32> to vector<8x1xf32>
    %22 = vector.broadcast %21 : vector<8x1xf32> to vector<8x4xf32>
    %23 = arith.divf %19, %22 : vector<8x4xf32>
    %c0_13 = arith.constant 0 : index
    %c0_14 = arith.constant 0 : index
    %24 = vector.load %arg6[%c0_13, %c0_14] : memref<8x4xf32, #tpu.memory_space<vmem>>, vector<8x4xf32>
    tpu.vector_store %arg6[%c0_13, %c0_14], %23 {strides = array<i32>} : memref<8x4xf32, #tpu.memory_space<vmem>>, vector<8x4xf32>,
    return
  }
  func.func @transform_0(%arg0: i32) -> (i32, i32) {
    %c0_i32 = arith.constant 0 : i32
    %c0_i32_0 = arith.constant 0 : i32
    return %arg0, %c0_i32 : i32, i32
  }
  func.func @transform_1(%arg0: i32) -> (i32, i32) {
    %c0_i32 = arith.constant 0 : i32
    %c0_i32_0 = arith.constant 0 : i32
    %c0_i32_1 = arith.constant 0 : i32
    return %c0_i32, %c0_i32_0 : i32, i32
  }
  func.func @transform_2(%arg0: i32) -> (i32, i32) {
    %c0_i32 = arith.constant 0 : i32
    %c0_i32_0 = arith.constant 0 : i32
    %c0_i32_1 = arith.constant 0 : i32
    return %c0_i32, %c0_i32_0 : i32, i32
  }
  func.func @transform_3(%arg0: i32) -> (i32, i32) {
    %c0_i32 = arith.constant 0 : i32
    %c0_i32_0 = arith.constant 0 : i32
    %c0_i32_1 = arith.constant 0 : i32
    return %c0_i32, %c0_i32_0 : i32, i32
  }
  func.func @transform_4(%arg0: i32) -> (i32, i32) {
    %c0_i32 = arith.constant 0 : i32
    %c0_i32_0 = arith.constant 0 : i32
    %c0_i32_1 = arith.constant 0 : i32
    return %c0_i32, %c0_i32_0 : i32, i32
  }
  func.func @transform_5(%arg0: i32) -> (i32, i32) {
    %c0_i32 = arith.constant 0 : i32
    %c0_i32_0 = arith.constant 0 : i32
    return %arg0, %c0_i32 : i32, i32
  }
}

</mosaic_0001>

<llo_original>
// kernel: tpu_custom_call.1
$region0: #{tpu_custom_call.1}
  #allocation0 [shape = 'u32[]', space=smem, size = 0x4, offset = 0x4, fixed_abs, tag = 'smem constant byte address 0x4 - core index']
  #allocation1 [shape = 'u32[144,128]{1,0:T(1,128)}', space=vmem, size = 0x12000, scoped, tag = 'internal scratch']
  %s0 = inlined_call_operand.vmem [shape: f32[8,8], index: 0, kind: input, shape index: {}]
  %s1 = inlined_call_operand.vmem [shape: bf16[8,256], index: 1, kind: input, shape index: {}]
  %s2 = inlined_call_operand.vmem [shape: f32[1,256], index: 2, kind: input, shape index: {}]
  %s3 = inlined_call_operand.vmem [shape: bf16[256,4], index: 3, kind: input, shape index: {}]
  %s4 = inlined_call_operand.vmem [shape: f32[1,4], index: 4, kind: input, shape index: {}]
  %s5 = inlined_call_operand.vmem [shape: f32[8,4], index: 5, kind: output, shape index: {}]
  %s6 = sld [smem:[#allocation0]]
  $region30: #{tpu_custom_call.1} parent=0
    _
  %s8 = ssub.s32 1, %s6
  %s9 = scalar_select 0, %s8, %s6
  // Predicated region
  $region2: #{tpu_custom_call.1} parent=0 // pred_check
    _
  $region3: #{tpu_custom_call.1} parent=0 // pred_check_branch
    %11 = sbr.rel (0) target = $region5
  $region4: #{tpu_custom_call.1} parent=0 // pred_region
    _
  $region5: #{tpu_custom_call.1} parent=0 // pred_fallthru
    _
  // Predicated region
  $region6: #{tpu_custom_call.1} parent=0 // pred_check
    _
  $region7: #{tpu_custom_call.1} parent=0 // pred_check_branch
    %13 = sbr.rel (0) target = $region9
  $region8: #{tpu_custom_call.1} parent=0 // pred_region
    _
  $region9: #{tpu_custom_call.1} parent=0 // pred_fallthru
    _
  // Predicated region
  $region10: #{tpu_custom_call.1} parent=0 // pred_check
    _
  $region11: #{tpu_custom_call.1} parent=0 // pred_check_branch
    %15 = sbr.rel (0) target = $region13
  $region12: #{tpu_custom_call.1} parent=0 // pred_region
    _
  $region13: #{tpu_custom_call.1} parent=0 // pred_fallthru
    _
  // Predicated region
  $region14: #{tpu_custom_call.1} parent=0 // pred_check
    _
  $region15: #{tpu_custom_call.1} parent=0 // pred_check_branch
    %17 = sbr.rel (0) target = $region17
  $region16: #{tpu_custom_call.1} parent=0 // pred_region
    _
  $region17: #{tpu_custom_call.1} parent=0 // pred_fallthru
    _
  // Predicated region
  $region18: #{tpu_custom_call.1} parent=0 // pred_check
    _
  $region19: #{tpu_custom_call.1} parent=0 // pred_check_branch
    %19 = sbr.rel (0) target = $region21
  $region20: #{tpu_custom_call.1} parent=0 // pred_region
    _
  $region21: #{tpu_custom_call.1} parent=0 // pred_fallthru
    _
  %v21 = vld [vmem:[%s0] sm:$0xff]
  %v22 = vpack.c.bf16 %v21, %v21
  %v23 = vld [vmem:[%s1] sm:$0xff]
  %v24 = vld [vmem:[%s2] sm:$0x3]
  %v26 = vlaneseq
  %v27 = vshrl.u32 %v26, 7
  %v28 = vsub.s32 0, %v27
  %v29 = vrot.slane %v24, %v28
  %v30 = vlaneseq
  %v31 = vshrl.u32 %v30, 7
  %v32 = vsub.s32 1, %v31
  %v33 = vrot.slane %v24, %v32
  %v37 = vunpack.c.l.b16 %v23
  %v38 = vunpack.c.h.b16 %v23
  %v39 = vpack.c.b16 %v37, %v37
  %v40 = vpack.c.b16 %v38, %v38
  %vm41 = vcmask 64512
  %v43 = vsel %vm41, %v22, 0
  %vm45 = vcmask 1043456
  %v47 = vsel %vm45, %v39, 0
  %v50 = vsel %vm45, %v40, 0
  %52 = vmatprep.subr.bf16.mxu0 0
  %53 = vmatpush1.bf16.msra.mxu0 0
  %54 = vmatprep.subr.bf16.mxu0 0
  %55 = vmatpush1.bf16.msra.mxu0 0
  %56 = vmatprep.subr.bf16.mxu0 0
  %57 = vmatpush1.bf16.msra.mxu0 0
  %58 = vmatprep.subr.bf16.mxu0 0
  %59 = vmatpush1.bf16.msra.mxu0 0
  %60 = vmatprep.subr.bf16.mxu0 0
  %61 = vmatpush1.bf16.msra.mxu0 0
  %62 = vmatprep.subr.bf16.mxu0 0
  %63 = vmatpush1.bf16.msra.mxu0 0
  %64 = vmatprep.subr.bf16.mxu0 0
  %65 = vmatpush1.bf16.msra.mxu0 0
  %66 = vmatprep.subr.bf16.mxu0 %v50
  %67 = vmatpush1.bf16.msra.mxu0 %v47
  %68 = vmatprep.subr.bf16.mxu0 0
  %69 = vmatpush2.bf16.msra.mxu0 0
  %70 = vmatprep.subr.bf16.mxu0 0
  %71 = vmatpush2.bf16.msra.mxu0 0
  %72 = vmatprep.subr.bf16.mxu0 0
  %73 = vmatpush2.bf16.msra.mxu0 0
  %74 = vmatprep.subr.bf16.mxu0 0
  %75 = vmatpush2.bf16.msra.mxu0 0
  %76 = vmatprep.subr.bf16.mxu0 0
  %77 = vmatpush2.bf16.msra.mxu0 0
  %78 = vmatprep.subr.bf16.mxu0 0
  %79 = vmatpush2.bf16.msra.mxu0 0
  %80 = vmatprep.subr.bf16.mxu0 0
  %81 = vmatpush2.bf16.msra.mxu0 0
  %82 = vmatprep.subr.bf16.mxu0 0
  %83 = vmatpush2.bf16.msra.mxu0 0
  %84 = vmatprep.mubr.bf16.mxu0 0
  %85 = vmatmul.mubr.bf16.gmra.mxu0 %v43
  %v86 = vpop.f32.mrf.mxu0
  %v87 = vadd.f32 %v29, %v86
  %v88 = vpop.f32.mrf.mxu0
  %v89 = vadd.f32 %v33, %v88
  %v90 = vpop.f32.mrf.mxu0
  %v91 = vpop.f32.mrf.mxu0
  %92 = vdwg.mxu0
  %v93 = vmax.f32 %v87, 0.0
  %v94 = vmax.f32 %v89, 0.0
  %v95 = vpack.c.bf16 %v93, %v93
  %v96 = vpack.c.bf16 %v94, %v94
  %v97 = vld [vmem:[%s3] sm:$0xf]
  %v98 = vld [vmem:[%s3 + $0x4] sm:$0xf]
  %v99 = vld [vmem:[%s3 + $0x8] sm:$0xf]
  %v100 = vld [vmem:[%s3 + $0xc] sm:$0xf]
  %v101 = vld [vmem:[%s3 + $0x10] sm:$0xf]
  %v102 = vld [vmem:[%s3 + $0x14] sm:$0xf]
  %v103 = vld [vmem:[%s3 + $0x18] sm:$0xf]
  %v104 = vld [vmem:[%s3 + $0x1c] sm:$0xf]
  %v105 = vld [vmem:[%s3 + $0x20] sm:$0xf]
  %v106 = vld [vmem:[%s3 + $0x24] sm:$0xf]
  %v107 = vld [vmem:[%s3 + $0x28] sm:$0xf]
  %v108 = vld [vmem:[%s3 + $0x2c] sm:$0xf]
  %v109 = vld [vmem:[%s3 + $0x30] sm:$0xf]
  %v110 = vld [vmem:[%s3 + $0x34] sm:$0xf]
  %v111 = vld [vmem:[%s3 + $0x38] sm:$0xf]
  %v112 = vld [vmem:[%s3 + $0x3c] sm:$0xf]
  %v113 = vld [vmem:[%s3 + $0x40] sm:$0xf]
  %v114 = vld [vmem:[%s3 + $0x44] sm:$0xf]
  %v115 = vld [vmem:[%s3 + $0x48] sm:$0xf]
  %v116 = vld [vmem:[%s3 + $0x4c] sm:$0xf]
  %v117 = vld [vmem:[%s3 + $0x50] sm:$0xf]
  %v118 = vld [vmem:[%s3 + $0x54] sm:$0xf]
  %v119 = vld [vmem:[%s3 + $0x58] sm:$0xf]
  %v120 = vld [vmem:[%s3 + $0x5c] sm:$0xf]
  %v121 = vld [vmem:[%s3 + $0x60] sm:$0xf]
  %v122 = vld [vmem:[%s3 + $0x64] sm:$0xf]
  %v123 = vld [vmem:[%s3 + $0x68] sm:$0xf]
  %v124 = vld [vmem:[%s3 + $0x6c] sm:$0xf]
  %v125 = vld [vmem:[%s3 + $0x70] sm:$0xf]
  %v126 = vld [vmem:[%s3 + $0x74] sm:$0xf]
  %v127 = vld [vmem:[%s3 + $0x78] sm:$0xf]
  %v128 = vld [vmem:[%s3 + $0x7c] sm:$0xf]
  %v129 = vld [vmem:[%s4] sm:$0x1]
  %v131 = vlaneseq
  %v132 = vshrl.u32 %v131, 7
  %v133 = vsub.s32 0, %v132
  %v134 = vrot.slane %v129, %v133
  %v168 = vunpack.c.l.b16 %v97
  %v169 = vunpack.c.l.b16 %v98
  %v170 = vunpack.c.l.b16 %v99
  %v171 = vunpack.c.l.b16 %v100
  %v172 = vunpack.c.l.b16 %v101
  %v173 = vunpack.c.l.b16 %v102
  %v174 = vunpack.c.l.b16 %v103
  %v175 = vunpack.c.l.b16 %v104
  %v176 = vunpack.c.l.b16 %v105
  %v177 = vunpack.c.l.b16 %v106
  %v178 = vunpack.c.l.b16 %v107
  %v179 = vunpack.c.l.b16 %v108
  %v180 = vunpack.c.l.b16 %v109
  %v181 = vunpack.c.l.b16 %v110
  %v182 = vunpack.c.l.b16 %v111
  %v183 = vunpack.c.l.b16 %v112
  %v184 = vunpack.c.l.b16 %v113
  %v185 = vunpack.c.l.b16 %v114
  %v186 = vunpack.c.l.b16 %v115
  %v187 = vunpack.c.l.b16 %v116
  %v188 = vunpack.c.l.b16 %v117
  %v189 = vunpack.c.l.b16 %v118
  %v190 = vunpack.c.l.b16 %v119
  %v191 = vunpack.c.l.b16 %v120
  %v192 = vunpack.c.l.b16 %v121
  %v193 = vunpack.c.l.b16 %v122
  %v194 = vunpack.c.l.b16 %v123
  %v195 = vunpack.c.l.b16 %v124
  %v196 = vunpack.c.l.b16 %v125
  %v197 = vunpack.c.l.b16 %v126
  %v198 = vunpack.c.l.b16 %v127
  %v199 = vunpack.c.l.b16 %v128
  %v200 = vpack.c.b16 %v169, %v168
  %v201 = vpack.c.b16 %v171, %v170
  %v202 = vpack.c.b16 %v173, %v172
  %v203 = vpack.c.b16 %v175, %v174
  %v204 = vpack.c.b16 %v177, %v176
  %v205 = vpack.c.b16 %v179, %v178
  %v206 = vpack.c.b16 %v181, %v180
  %v207 = vpack.c.b16 %v183, %v182
  %v208 = vpack.c.b16 %v185, %v184
  %v209 = vpack.c.b16 %v187, %v186
  %v210 = vpack.c.b16 %v189, %v188
  %v211 = vpack.c.b16 %v191, %v190
  %v212 = vpack.c.b16 %v193, %v192
  %v213 = vpack.c.b16 %v195, %v194
  %v214 = vpack.c.b16 %v197, %v196
  %v215 = vpack.c.b16 %v199, %v198
  %232 = vmatprep.subr.bf16.mxu0 0
  %233 = vmatpush1.bf16.msra.mxu0 %v207
  %234 = vmatprep.subr.bf16.mxu0 0
  %235 = vmatpush1.bf16.msra.mxu0 %v206
  %236 = vmatprep.subr.bf16.mxu0 0
  %237 = vmatpush1.bf16.msra.mxu0 %v205
  %238 = vmatprep.subr.bf16.mxu0 0
  %239 = vmatpush1.bf16.msra.mxu0 %v204
  %240 = vmatprep.subr.bf16.mxu0 0
  %241 = vmatpush1.bf16.msra.mxu0 %v203
  %242 = vmatprep.subr.bf16.mxu0 0
  %243 = vmatpush1.bf16.msra.mxu0 %v202
  %244 = vmatprep.subr.bf16.mxu0 0
  %245 = vmatpush1.bf16.msra.mxu0 %v201
  %246 = vmatprep.subr.bf16.mxu0 0
  %247 = vmatpush1.bf16.msra.mxu0 %v200
  %248 = vmatprep.subr.bf16.mxu0 0
  %249 = vmatpush2.bf16.msra.mxu0 %v215
  %250 = vmatprep.subr.bf16.mxu0 0
  %251 = vmatpush2.bf16.msra.mxu0 %v214
  %252 = vmatprep.subr.bf16.mxu0 0
  %253 = vmatpush2.bf16.msra.mxu0 %v213
  %254 = vmatprep.subr.bf16.mxu0 0
  %255 = vmatpush2.bf16.msra.mxu0 %v212
  %256 = vmatprep.subr.bf16.mxu0 0
  %257 = vmatpush2.bf16.msra.mxu0 %v211
  %258 = vmatprep.subr.bf16.mxu0 0
  %259 = vmatpush2.bf16.msra.mxu0 %v210
  %260 = vmatprep.subr.bf16.mxu0 0
  %261 = vmatpush2.bf16.msra.mxu0 %v209
  %262 = vmatprep.subr.bf16.mxu0 0
  %263 = vmatpush2.bf16.msra.mxu0 %v208
  %264 = vmatprep.mubr.bf16.mxu0 %v96
  %265 = vmatmul.mubr.bf16.gmra.mxu0 %v95
  %v266 = vpop.f32.mrf.mxu0
  %v267 = vadd.f32 %v134, %v266
  %v268 = vpop.f32.mrf.mxu0
  %v269 = vpop.f32.mrf.mxu0
  %v270 = vpop.f32.mrf.mxu0
  %271 = vdwg.mxu0
  %vm272 = vcmask 31744
  %v273 = vsel %vm272, %v267, -inf
  %274 = vmax.xlane.f32.xlu0 %v273
  %v275 = vpop.xlane.xlu0 %274
  %v276 = vsub.f32 %v267, %v275
  %v277 = vmul.f32 %v276, 1.442695
  %v278 = vpow.pop %v277
  %v279 = vsel %vm272, %v278, 0.0
  %280 = vadd.xlane.f32.xlu0 %v279
  %v281 = vpop.xlane.xlu0 %280
  %v282 = vrcp.pop %v281
  %v283 = vmul.f32 %v278, %v282
  %284 = vst.msk [vmem:[%s5] sm:$0xff] %vm272, %v283
  // Predicated region
  $region22: #{tpu_custom_call.1} parent=0 // pred_check
    _
  $region23: #{tpu_custom_call.1} parent=0 // pred_check_branch
    %286 = sbr.rel (0) target = $region25
  $region24: #{tpu_custom_call.1} parent=0 // pred_region
    _
  $region25: #{tpu_custom_call.1} parent=0 // pred_fallthru
    _
  // Predicated region
  $region26: #{tpu_custom_call.1} parent=0 // pred_check
    _
  $region27: #{tpu_custom_call.1} parent=0 // pred_check_branch
    %288 = sbr.rel (0) target = $region29
  $region28: #{tpu_custom_call.1} parent=0 // pred_region
    _
  $region29: #{tpu_custom_call.1} parent=0 // pred_fallthru
    _

</llo_original>
